<compile_context>
chip_gen: v7x
topology: tpu7x:2x2x1
jax: 0.10.0
libtpu: 0.0.40
codegen_flags: <defaults>
</compile_context>

<pallas_src>
import jax
import jax.numpy as jnp
from jax.experimental import pallas as pl
from jax.experimental.pallas import tpu as pltpu

N_INPUT = 784
HIDDEN = [256, 256]
N_CLASSES = 10
N_CLASSES_PAD = 128          # lane-dense classifier output (sliced to 10 in the wrapper)
NEG_PAD_BIAS = -1e9          # padded classes get a huge negative bias (argmax-safe)


def _mlp_kernel(x_ref, w1_ref, b1_ref, w2_ref, b2_ref, w3_ref, b3_ref, o_ref):
    """Fused 3-layer MLP on one batch tile.

    x arrives as f32 and is cast to the weights' dtype (bf16) in-kernel; all
    MXU accumulation, bias-add and ReLU are done in f32; output stored bf16.
    """
    mm_dtype = w1_ref.dtype
    x = x_ref[...].astype(mm_dtype)            # f32 -> bf16 on the VPU (hidden under DMA/MXU)
    # Hidden layer 1: Linear + ReLU
    h = jnp.dot(x, w1_ref[...], preferred_element_type=jnp.float32)
    h = jnp.maximum(h + b1_ref[...], 0.0)
    # Hidden layer 2: Linear + ReLU
    h = jnp.dot(h.astype(mm_dtype), w2_ref[...], preferred_element_type=jnp.float32)
    h = jnp.maximum(h + b2_ref[...], 0.0)
    # Classifier: Linear (output padded to 128 lanes; padded w3 cols are 0, padded b3 is -1e9)
    out = jnp.dot(h.astype(mm_dtype), w3_ref[...], preferred_element_type=jnp.float32)
    o_ref[...] = (out + b3_ref[...]).astype(o_ref.dtype)


def prepare_params(params, matmul_dtype=jnp.bfloat16):
    """Pad + cast the f32 params once for the kernel.

    w1: [784,256]              cast to matmul_dtype (no feature padding)
    w2: [256,256]              cast to matmul_dtype
    w3: [256,10]  -> [256,128] (zero cols), cast to matmul_dtype
    b1/b2 kept f32; b3 padded [1,10] -> [1,128] with NEG_PAD_BIAS in padded cols, kept f32.
    """
    w3 = jnp.zeros((HIDDEN[1], N_CLASSES_PAD), jnp.float32).at[:, :N_CLASSES].set(params["w3"])
    b3 = jnp.full((1, N_CLASSES_PAD), NEG_PAD_BIAS, jnp.float32).at[:, :N_CLASSES].set(params["b3"])
    return {
        "w1": params["w1"].astype(matmul_dtype),
        "b1": params["b1"].astype(jnp.float32),
        "w2": params["w2"].astype(matmul_dtype),
        "b2": params["b2"].astype(jnp.float32),
        "w3": w3.astype(matmul_dtype),
        "b3": b3,
    }


def _round_up(v, m):
    return ((v + m - 1) // m) * m


def _choose_batch_tile(B):
    """Adaptive batch tile: no 32x padding for tiny batches, >=2 tiles (v7x megacore)
    for medium batches, 512-row tiles (near HBM-roofline) for large batches."""
    if B <= 8:
        return 8
    if B <= 1024:
        return max(8, _round_up(-(-B // 2), 8))   # ceil(B/2) rounded up to sublane multiple
    return 512


@jax.jit
def linear_model_forward(x, kparams):
    """Fused 3-layer MLP forward pass in a single Pallas kernel.

    x: [B, 784] float32
    kparams: output of prepare_params (padded / bf16-cast weights)
    returns: logits [B, 10] float32
    """
    B = x.shape[0]
    batch_tile = _choose_batch_tile(B)
    B_pad = _round_up(B, batch_tile)
    if B_pad != B:
        # Pad only the batch dim (rows of zeros); features stay 784, dtype stays f32.
        x = jnp.pad(x, ((0, B_pad - B), (0, 0)))

    w1, b1 = kparams["w1"], kparams["b1"]
    w2, b2 = kparams["w2"], kparams["b2"]
    w3, b3 = kparams["w3"], kparams["b3"]

    grid = (B_pad // batch_tile,)

    # Weight / bias blocks: full array, constant (0, 0) block index -> DMA'd once.
    full = lambda arr: pl.BlockSpec(arr.shape, lambda i: (0, 0))

    flops = 2 * B_pad * (N_INPUT * HIDDEN[0]
                         + HIDDEN[0] * HIDDEN[1]
                         + HIDDEN[1] * N_CLASSES_PAD)
    bytes_accessed = (B_pad * N_INPUT * 4                                   # f32 x
                      + sum(v.size * v.dtype.itemsize for v in kparams.values())
                      + B_pad * N_CLASSES_PAD * 2)                          # bf16 out

    out = pl.pallas_call(
        _mlp_kernel,
        out_shape=jax.ShapeDtypeStruct((B_pad, N_CLASSES_PAD), jnp.bfloat16),
        grid_spec=pltpu.PrefetchScalarGridSpec(
            num_scalar_prefetch=0,
            grid=grid,
            in_specs=[
                # x tile: last dim 784 == full array dim, so lane rule is satisfied.
                pl.BlockSpec((batch_tile, N_INPUT), lambda i: (i, 0)),
                full(w1), full(b1),
                full(w2), full(b2),
                full(w3), full(b3),
            ],
            out_specs=pl.BlockSpec((batch_tile, N_CLASSES_PAD), lambda i: (i, 0)),
        ),
        compiler_params=pltpu.CompilerParams(
            dimension_semantics=("parallel",),   # batch tiles shard across TCs (v7x)
        ),
        cost_estimate=pl.CostEstimate(
            flops=flops, transcendentals=0, bytes_accessed=bytes_accessed),
    )(x, w1, b1, w2, b2, w3, b3)

    # Strip batch padding and padded classifier lanes; cast back to f32 (tiny).
    return out[:B, :N_CLASSES].astype(jnp.float32)


def init_params(key):
    """Deterministic init mirroring nn.Linear's default U(-1/sqrt(fan_in), 1/sqrt(fan_in))."""
    dims = [N_INPUT] + HIDDEN + [N_CLASSES]
    params = {}
    keys = jax.random.split(key, 2 * (len(dims) - 1))
    for li in range(len(dims) - 1):
        fan_in, fan_out = dims[li], dims[li + 1]
        bound = 1.0 / jnp.sqrt(jnp.float32(fan_in))
        wk, bk = keys[2 * li], keys[2 * li + 1]
        params[f"w{li + 1}"] = jax.random.uniform(
            wk, (fan_in, fan_out), jnp.float32, -bound, bound)
        params[f"b{li + 1}"] = jax.random.uniform(
            bk, (1, fan_out), jnp.float32, -bound, bound)
    return params


def reference_forward_f32(x, params):
    """Pure-f32 JAX reference (matches the PyTorch module exactly)."""
    h = jnp.maximum(x @ params["w1"] + params["b1"], 0.0)
    h = jnp.maximum(h @ params["w2"] + params["b2"], 0.0)
    return h @ params["w3"] + params["b3"]


def reference_forward_matched(x, params, matmul_dtype=jnp.bfloat16):
    """Reference applying the same bf16 matmul-input quantization as the kernel."""
    d = matmul_dtype
    h = jnp.dot(x.astype(d), params["w1"].astype(d),
                preferred_element_type=jnp.float32) + params["b1"]
    h = jnp.maximum(h, 0.0)
    h = jnp.dot(h.astype(d), params["w2"].astype(d),
                preferred_element_type=jnp.float32) + params["b2"]
    h = jnp.maximum(h, 0.0)
    return jnp.dot(h.astype(d), params["w3"].astype(d),
                   preferred_element_type=jnp.float32) + params["b3"]


def _check(x, params, kparams):
    logits = jax.block_until_ready(linear_model_forward(x, kparams))
    assert logits.shape == (x.shape[0], N_CLASSES)
    # Tight-ish check vs. a reference with identical bf16 matmul-input quantization
    # (kernel additionally rounds the stored logits to bf16, hence the 2e-2 tolerance).
    ref_matched = reference_forward_matched(x, params)
    assert jnp.allclose(logits, ref_matched, atol=2e-2, rtol=2e-2), \
        "mismatch vs bf16-matched reference"
    # Loose sanity check vs. the pure-f32 reference (bf16 quantization noise).
    ref_f32 = reference_forward_f32(x, params)
    assert jnp.allclose(logits, ref_f32, atol=1e-1, rtol=1e-1), \
        "mismatch vs f32 reference"
    return logits


if __name__ == "__main__":
    key = jax.random.PRNGKey(0)
    pkey, xkey, xkey2 = jax.random.split(key, 3)

    params = init_params(pkey)
    kparams = prepare_params(params)   # pad classifier + bf16-cast once

    # Small batch of flattened 28x28 "images" (values in [0, 1)) — single 8-row tile.
    x_small = jax.random.uniform(xkey, (8, N_INPUT), jnp.float32)
    logits = _check(x_small, params, kparams)

    # Non-multiple-of-tile batch — exercises batch padding + the 2-tile parallel grid.
    x_med = jax.random.uniform(xkey2, (24, N_INPUT), jnp.float32)
    _check(x_med, params, kparams)

    # predict() equivalent (argmax over the 10 real classes) — plain JAX glue.
    preds = jnp.argmax(logits, axis=1)
    _ = jax.block_until_ready(preds)

    print("KERNEL_OK")
</pallas_src>

<mosaic_0001>
module attributes {stable_mosaic.version = 11 : i64} {
  func.func @_mlp_kernel(%arg0: i32, %arg1: memref<8x784xf32, #tpu.memory_space<vmem>>, %arg2: memref<784x256xbf16, #tpu.memory_space<vmem>>, %arg3: memref<1x256xf32, #tpu.memory_space<vmem>>, %arg4: memref<256x256xbf16, #tpu.memory_space<vmem>>, %arg5: memref<1x256xf32, #tpu.memory_space<vmem>>, %arg6: memref<256x128xbf16, #tpu.memory_space<vmem>>, %arg7: memref<1x128xf32, #tpu.memory_space<vmem>>, %arg8: memref<8x128xbf16, #tpu.memory_space<vmem>>) attributes {dimension_semantics = [#tpu.dimension_semantics<parallel>], iteration_bounds = array<i64: 1>, scalar_prefetch = 0 : i64, scratch_operands = 0 : i64, tpu.core_type = #tpu.core_type<tc>, window_params = [{transform_indices = @transform_0, window_bounds = array<i64: 8, 784>}, {pipeline_mode = #tpu.pipeline_mode<synchronous>, transform_indices = @transform_1, window_bounds = array<i64: 784, 256>}, {pipeline_mode = #tpu.pipeline_mode<synchronous>, transform_indices = @transform_2, window_bounds = array<i64: 1, 256>}, {pipeline_mode = #tpu.pipeline_mode<synchronous>, transform_indices = @transform_3, window_bounds = array<i64: 256, 256>}, {pipeline_mode = #tpu.pipeline_mode<synchronous>, transform_indices = @transform_4, window_bounds = array<i64: 1, 256>}, {pipeline_mode = #tpu.pipeline_mode<synchronous>, transform_indices = @transform_5, window_bounds = array<i64: 256, 128>}, {pipeline_mode = #tpu.pipeline_mode<synchronous>, transform_indices = @transform_6, window_bounds = array<i64: 1, 128>}, {transform_indices = @transform_7, window_bounds = array<i64: 8, 128>}]} {
    %c0 = arith.constant 0 : index
    %c0_0 = arith.constant 0 : index
    %0 = vector.load %arg1[%c0, %c0_0] : memref<8x784xf32, #tpu.memory_space<vmem>>, vector<8x784xf32>
    %1 = arith.truncf %0 : vector<8x784xf32> to vector<8x784xbf16>
    %c0_1 = arith.constant 0 : index
    %c0_2 = arith.constant 0 : index
    %2 = vector.load %arg2[%c0_1, %c0_2] : memref<784x256xbf16, #tpu.memory_space<vmem>>, vector<784x256xbf16>
    %cst = arith.constant dense<0.000000e+00> : vector<8x256xf32>
    %3 = tpu.matmul %1, %2, %cst {dimension_numbers = #tpu.dot_dimension_numbers<[1], [0], [0], [1], [0, 0, 1, 1], [], []>} : vector<8x784xbf16>, vector<784x256xbf16>, vector<8x256xf32> -> vector<8x256xf32>
    %c0_3 = arith.constant 0 : index
    %c0_4 = arith.constant 0 : index
    %4 = vector.load %arg3[%c0_3, %c0_4] : memref<1x256xf32, #tpu.memory_space<vmem>>, vector<1x256xf32>
    %5 = vector.broadcast %4 : vector<1x256xf32> to vector<8x256xf32>
    %6 = arith.addf %3, %5 : vector<8x256xf32>
    %cst_5 = arith.constant 0.000000e+00 : f32
    %7 = vector.broadcast %cst_5 : f32 to vector<8x256xf32>
    %8 = arith.maximumf %6, %7 : vector<8x256xf32>
    %9 = arith.truncf %8 : vector<8x256xf32> to vector<8x256xbf16>
    %c0_6 = arith.constant 0 : index
    %c0_7 = arith.constant 0 : index
    %10 = vector.load %arg4[%c0_6, %c0_7] : memref<256x256xbf16, #tpu.memory_space<vmem>>, vector<256x256xbf16>
    %cst_8 = arith.constant dense<0.000000e+00> : vector<8x256xf32>
    %11 = tpu.matmul %9, %10, %cst_8 {dimension_numbers = #tpu.dot_dimension_numbers<[1], [0], [0], [1], [0, 0, 1, 1], [], []>} : vector<8x256xbf16>, vector<256x256xbf16>, vector<8x256xf32> -> vector<8x256xf32>
    %c0_9 = arith.constant 0 : index
    %c0_10 = arith.constant 0 : index
    %12 = vector.load %arg5[%c0_9, %c0_10] : memref<1x256xf32, #tpu.memory_space<vmem>>, vector<1x256xf32>
    %13 = vector.broadcast %12 : vector<1x256xf32> to vector<8x256xf32>
    %14 = arith.addf %11, %13 : vector<8x256xf32>
    %cst_11 = arith.constant 0.000000e+00 : f32
    %15 = vector.broadcast %cst_11 : f32 to vector<8x256xf32>
    %16 = arith.maximumf %14, %15 : vector<8x256xf32>
    %17 = arith.truncf %16 : vector<8x256xf32> to vector<8x256xbf16>
    %c0_12 = arith.constant 0 : index
    %c0_13 = arith.constant 0 : index
    %18 = vector.load %arg6[%c0_12, %c0_13] : memref<256x128xbf16, #tpu.memory_space<vmem>>, vector<256x128xbf16>
    %cst_14 = arith.constant dense<0.000000e+00> : vector<8x128xf32>
    %19 = tpu.matmul %17, %18, %cst_14 {dimension_numbers = #tpu.dot_dimension_numbers<[1], [0], [0], [1], [0, 0, 1, 1], [], []>} : vector<8x256xbf16>, vector<256x128xbf16>, vector<8x128xf32> -> vector<8x128xf32>
    %c0_15 = arith.constant 0 : index
    %c0_16 = arith.constant 0 : index
    %20 = vector.load %arg7[%c0_15, %c0_16] : memref<1x128xf32, #tpu.memory_space<vmem>>, vector<1x128xf32>
    %21 = vector.broadcast %20 : vector<1x128xf32> to vector<8x128xf32>
    %22 = arith.addf %19, %21 : vector<8x128xf32>
    %23 = arith.truncf %22 : vector<8x128xf32> to vector<8x128xbf16>
    %c0_17 = arith.constant 0 : index
    %c0_18 = arith.constant 0 : index
    %24 = vector.load %arg8[%c0_17, %c0_18] : memref<8x128xbf16, #tpu.memory_space<vmem>>, vector<8x128xbf16>
    tpu.vector_store %arg8[%c0_17, %c0_18], %23 {strides = array<i32>} : memref<8x128xbf16, #tpu.memory_space<vmem>>, vector<8x128xbf16>,
    return
  }
  func.func @transform_0(%arg0: i32) -> (i32, i32) {
    %c0_i32 = arith.constant 0 : i32
    %c0_i32_0 = arith.constant 0 : i32
    return %arg0, %c0_i32 : i32, i32
  }
  func.func @transform_1(%arg0: i32) -> (i32, i32) {
    %c0_i32 = arith.constant 0 : i32
    %c0_i32_0 = arith.constant 0 : i32
    %c0_i32_1 = arith.constant 0 : i32
    return %c0_i32, %c0_i32_0 : i32, i32
  }
  func.func @transform_2(%arg0: i32) -> (i32, i32) {
    %c0_i32 = arith.constant 0 : i32
    %c0_i32_0 = arith.constant 0 : i32
    %c0_i32_1 = arith.constant 0 : i32
    return %c0_i32, %c0_i32_0 : i32, i32
  }
  func.func @transform_3(%arg0: i32) -> (i32, i32) {
    %c0_i32 = arith.constant 0 : i32
    %c0_i32_0 = arith.constant 0 : i32
    %c0_i32_1 = arith.constant 0 : i32
    return %c0_i32, %c0_i32_0 : i32, i32
  }
  func.func @transform_4(%arg0: i32) -> (i32, i32) {
    %c0_i32 = arith.constant 0 : i32
    %c0_i32_0 = arith.constant 0 : i32
    %c0_i32_1 = arith.constant 0 : i32
    return %c0_i32, %c0_i32_0 : i32, i32
  }
  func.func @transform_5(%arg0: i32) -> (i32, i32) {
    %c0_i32 = arith.constant 0 : i32
    %c0_i32_0 = arith.constant 0 : i32
    %c0_i32_1 = arith.constant 0 : i32
    return %c0_i32, %c0_i32_0 : i32, i32
  }
  func.func @transform_6(%arg0: i32) -> (i32, i32) {
    %c0_i32 = arith.constant 0 : i32
    %c0_i32_0 = arith.constant 0 : i32
    %c0_i32_1 = arith.constant 0 : i32
    return %c0_i32, %c0_i32_0 : i32, i32
  }
  func.func @transform_7(%arg0: i32) -> (i32, i32) {
    %c0_i32 = arith.constant 0 : i32
    %c0_i32_0 = arith.constant 0 : i32
    return %arg0, %c0_i32 : i32, i32
  }
}

</mosaic_0001>

<llo_original>
// kernel: linear_model_forward.1
$region0: #{linear_model_forward.1}
  #allocation0 [shape = 'u32[]', space=smem, size = 0x4, offset = 0x4, fixed_abs, tag = 'smem constant byte address 0x4 - core index']
  #allocation1 [shape = 'u32[144,128]{1,0:T(1,128)}', space=vmem, size = 0x12000, scoped, tag = 'internal scratch']
  %s0 = inlined_call_operand.hbm [shape: f32[8,784], index: 0, kind: input, shape index: {}]
  %s1 = inlined_call_operand.hbm [shape: bf16[784,256], index: 1, kind: input, shape index: {}]
  %s2 = inlined_call_operand.vmem [shape: f32[1,256], index: 2, kind: input, shape index: {}]
  %s3 = inlined_call_operand.hbm [shape: bf16[256,256], index: 3, kind: input, shape index: {}]
  %s4 = inlined_call_operand.vmem [shape: f32[1,256], index: 4, kind: input, shape index: {}]
  %s5 = inlined_call_operand.hbm [shape: bf16[256,128], index: 5, kind: input, shape index: {}]
  %s6 = inlined_call_operand.vmem [shape: f32[1,128], index: 6, kind: input, shape index: {}]
  %s7 = inlined_call_operand.vmem [shape: bf16[8,128], index: 7, kind: output, shape index: {}]
  %s8 = sld [smem:[#allocation0]]
  $region54: #{linear_model_forward.1} parent=0
    _
  %s10 = ssub.s32 1, %s8
  %s11 = scalar_select 0, %s10, %s8
  $region1: #{linear_model_forward.1} parent=0
    #allocation2 [shape = 'u8[28672]{0}', space=vmem, size = 0x7000, scoped, tag = 'input window, operand 0, single buffered']
    #allocation3 [shape = 's32[1]{0}', space=sflag, size = 0x4, scoped, tag = 'scoped memory for linear_model_forward.1']
    #allocation4 [shape = 'u8[401408]{0}', space=vmem, size = 0x62000, scoped, tag = 'input window, operand 1, single buffered']
    #allocation5 [shape = 's32[1]{0}', space=sflag, size = 0x4, scoped, tag = 'scoped memory for linear_model_forward.1']
    #allocation6 [shape = 'u8[131072]{0}', space=vmem, size = 0x20000, scoped, tag = 'input window, operand 3, single buffered']
    #allocation7 [shape = 'u8[65536]{0}', space=vmem, size = 0x10000, scoped, tag = 'input window, operand 5, single buffered']
    #allocation8 [shape = 's32[1]{0}', space=sflag, size = 0x4, scoped, tag = 'scoped memory for linear_model_forward.1']
    %12 = vsyncpa [#allocation3], 0
    %13 = vsyncpa [#allocation5], 0
    %14 = vsyncpa [#allocation8], 0
    // Predicated region
    $region2: #{linear_model_forward.1} parent=1 // pred_check
      _
    $region3: #{linear_model_forward.1} parent=1 // pred_check_branch
      %16 = sbr.rel (0) target = $region5
    $region4: #{linear_model_forward.1} parent=1 // pred_region
      %s18 = ssub.s32 896, 896
      %19 = vsyncadd [#allocation3], %s18
      %s21 = sshll.u32 [#allocation2], 4
      %s22 = int_to_ptr.vmem [resolvable:$true] %s21
      %24 = dma.hbm_to_vmem [thread:$0]  %s0, 896, %s22, [#allocation3]
    $region5: #{linear_model_forward.1} parent=1 // pred_fallthru
      _
    // Predicated region
    $region6: #{linear_model_forward.1} parent=1 // pred_check
      _
    $region7: #{linear_model_forward.1} parent=1 // pred_check_branch
      %26 = sbr.rel (0) target = $region9
    $region8: #{linear_model_forward.1} parent=1 // pred_region
      %s28 = ssub.s32 12544, 12544
      %29 = vsyncadd [#allocation5], %s28
      %s30 = sshll.u32 [#allocation4], 4
      %s31 = int_to_ptr.vmem [resolvable:$true] %s30
      %36 = dma.hbm_to_vmem [thread:$0]  %s1, 12544, %s31, [#allocation5], 128, 128, 8
    $region9: #{linear_model_forward.1} parent=1 // pred_fallthru
      _
    // Predicated region
    $region10: #{linear_model_forward.1} parent=1 // pred_check
      _
    $region11: #{linear_model_forward.1} parent=1 // pred_check_branch
      %38 = sbr.rel (0) target = $region13
    $region12: #{linear_model_forward.1} parent=1 // pred_region
      _
    $region13: #{linear_model_forward.1} parent=1 // pred_fallthru
      _
    // Predicated region
    $region14: #{linear_model_forward.1} parent=1 // pred_check
      _
    $region15: #{linear_model_forward.1} parent=1 // pred_check_branch
      %40 = sbr.rel (0) target = $region17
    $region16: #{linear_model_forward.1} parent=1 // pred_region
      %s42 = ssub.s32 4096, 4096
      %43 = vsyncadd [#allocation5], %s42
      %s44 = sshll.u32 [#allocation6], 4
      %s45 = int_to_ptr.vmem [resolvable:$true] %s44
      %50 = dma.hbm_to_vmem [thread:$0]  %s3, 4096, %s45, [#allocation5], 128, 128, 8
    $region17: #{linear_model_forward.1} parent=1 // pred_fallthru
      _
    // Predicated region
    $region18: #{linear_model_forward.1} parent=1 // pred_check
      _
    $region19: #{linear_model_forward.1} parent=1 // pred_check_branch
      %52 = sbr.rel (0) target = $region21
    $region20: #{linear_model_forward.1} parent=1 // pred_region
      _
    $region21: #{linear_model_forward.1} parent=1 // pred_fallthru
      _
    // Predicated region
    $region22: #{linear_model_forward.1} parent=1 // pred_check
      _
    $region23: #{linear_model_forward.1} parent=1 // pred_check_branch
      %54 = sbr.rel (0) target = $region25
    $region24: #{linear_model_forward.1} parent=1 // pred_region
      %s56 = ssub.s32 2048, 2048
      %57 = vsyncadd [#allocation8], %s56
      %s58 = sshll.u32 [#allocation7], 4
      %s59 = int_to_ptr.vmem [resolvable:$true] %s58
      %64 = dma.hbm_to_vmem [thread:$0]  %s5, 2048, %s59, [#allocation8], 64, 64, 4
    $region25: #{linear_model_forward.1} parent=1 // pred_fallthru
      _
    // Predicated region
    $region26: #{linear_model_forward.1} parent=1 // pred_check
      _
    $region27: #{linear_model_forward.1} parent=1 // pred_check_branch
      %66 = sbr.rel (0) target = $region29
    $region28: #{linear_model_forward.1} parent=1 // pred_region
      _
    $region29: #{linear_model_forward.1} parent=1 // pred_fallthru
      _
    // Predicated region
    $region30: #{linear_model_forward.1} parent=1 // pred_check
      _
    $region31: #{linear_model_forward.1} parent=1 // pred_check_branch
      %68 = sbr.rel (0) target = $region33
    $region32: #{linear_model_forward.1} parent=1 // pred_region
      %69 = dma.done [#allocation3], 896
    $region33: #{linear_model_forward.1} parent=1 // pred_fallthru
      _
    // Predicated region
    $region34: #{linear_model_forward.1} parent=1 // pred_check
      _
    $region35: #{linear_model_forward.1} parent=1 // pred_check_branch
      %71 = sbr.rel (0) target = $region37
    $region36: #{linear_model_forward.1} parent=1 // pred_region
      %72 = dma.done [#allocation5], 12544
    $region37: #{linear_model_forward.1} parent=1 // pred_fallthru
      _
    // Predicated region
    $region38: #{linear_model_forward.1} parent=1 // pred_check
      _
    $region39: #{linear_model_forward.1} parent=1 // pred_check_branch
      %74 = sbr.rel (0) target = $region41
    $region40: #{linear_model_forward.1} parent=1 // pred_region
      %75 = dma.done [#allocation5], 4096
    $region41: #{linear_model_forward.1} parent=1 // pred_fallthru
      _
    // Predicated region
    $region42: #{linear_model_forward.1} parent=1 // pred_check
      _
    $region43: #{linear_model_forward.1} parent=1 // pred_check_branch
      %77 = sbr.rel (0) target = $region45
    $region44: #{linear_model_forward.1} parent=1 // pred_region
      %78 = dma.done [#allocation8], 2048
    $region45: #{linear_model_forward.1} parent=1 // pred_fallthru
      _
    %v80 = vld [vmem:[#allocation2] sm:$0xff]
    %v81 = vld [vmem:[#allocation2 + $0x8] sm:$0xff]
    %v82 = vld [vmem:[#allocation2 + $0x10] sm:$0xff]
    %v83 = vld [vmem:[#allocation2 + $0x18] sm:$0xff]
    %v84 = vld [vmem:[#allocation2 + $0x20] sm:$0xff]
    %v85 = vld [vmem:[#allocation2 + $0x28] sm:$0xff]
    %v86 = vld [vmem:[#allocation2 + $0x30] sm:$0xff]
    %v87 = vpack.c.bf16 %v80, %v80
    %v88 = vpack.c.bf16 %v81, %v81
    %v89 = vpack.c.bf16 %v82, %v82
    %v90 = vpack.c.bf16 %v83, %v83
    %v91 = vpack.c.bf16 %v84, %v84
    %v92 = vpack.c.bf16 %v85, %v85
    %v93 = vpack.c.bf16 %v86, %v86
    %v94 = vld [vmem:[#allocation4] sm:$0xff]
    %v95 = vld [vmem:[#allocation4 + $0x8] sm:$0xff]
    %v96 = vld [vmem:[#allocation4 + $0x10] sm:$0xff]
    %v97 = vld [vmem:[#allocation4 + $0x18] sm:$0xff]
    %v98 = vld [vmem:[#allocation4 + $0x20] sm:$0xff]
    %v99 = vld [vmem:[#allocation4 + $0x28] sm:$0xff]
    %v100 = vld [vmem:[#allocation4 + $0x30] sm:$0xff]
    %v101 = vld [vmem:[#allocation4 + $0x38] sm:$0xff]
    %v102 = vld [vmem:[#allocation4 + $0x40] sm:$0xff]
    %v103 = vld [vmem:[#allocation4 + $0x48] sm:$0xff]
    %v104 = vld [vmem:[#allocation4 + $0x50] sm:$0xff]
    %v105 = vld [vmem:[#allocation4 + $0x58] sm:$0xff]
    %v106 = vld [vmem:[#allocation4 + $0x60] sm:$0xff]
    %v107 = vld [vmem:[#allocation4 + $0x68] sm:$0xff]
    %v108 = vld [vmem:[#allocation4 + $0x70] sm:$0xff]
    %v109 = vld [vmem:[#allocation4 + $0x78] sm:$0xff]
    %v110 = vld [vmem:[#allocation4 + $0x80] sm:$0xff]
    %v111 = vld [vmem:[#allocation4 + $0x88] sm:$0xff]
    %v112 = vld [vmem:[#allocation4 + $0x90] sm:$0xff]
    %v113 = vld [vmem:[#allocation4 + $0x98] sm:$0xff]
    %v114 = vld [vmem:[#allocation4 + $0xa0] sm:$0xff]
    %v115 = vld [vmem:[#allocation4 + $0xa8] sm:$0xff]
    %v116 = vld [vmem:[#allocation4 + $0xb0] sm:$0xff]
    %v117 = vld [vmem:[#allocation4 + $0xb8] sm:$0xff]
    %v118 = vld [vmem:[#allocation4 + $0xc0] sm:$0xff]
    %v119 = vld [vmem:[#allocation4 + $0xc8] sm:$0xff]
    %v120 = vld [vmem:[#allocation4 + $0xd0] sm:$0xff]
    %v121 = vld [vmem:[#allocation4 + $0xd8] sm:$0xff]
    %v122 = vld [vmem:[#allocation4 + $0xe0] sm:$0xff]
    %v123 = vld [vmem:[#allocation4 + $0xe8] sm:$0xff]
    %v124 = vld [vmem:[#allocation4 + $0xf0] sm:$0xff]
    %v125 = vld [vmem:[#allocation4 + $0xf8] sm:$0xff]
    %v126 = vld [vmem:[#allocation4 + $0x100] sm:$0xff]
    %v127 = vld [vmem:[#allocation4 + $0x108] sm:$0xff]
    %v128 = vld [vmem:[#allocation4 + $0x110] sm:$0xff]
    %v129 = vld [vmem:[#allocation4 + $0x118] sm:$0xff]
    %v130 = vld [vmem:[#allocation4 + $0x120] sm:$0xff]
    %v131 = vld [vmem:[#allocation4 + $0x128] sm:$0xff]
    %v132 = vld [vmem:[#allocation4 + $0x130] sm:$0xff]
    %v133 = vld [vmem:[#allocation4 + $0x138] sm:$0xff]
    %v134 = vld [vmem:[#allocation4 + $0x140] sm:$0xff]
    %v135 = vld [vmem:[#allocation4 + $0x148] sm:$0xff]
    %v136 = vld [vmem:[#allocation4 + $0x150] sm:$0xff]
    %v137 = vld [vmem:[#allocation4 + $0x158] sm:$0xff]
    %v138 = vld [vmem:[#allocation4 + $0x160] sm:$0xff]
    %v139 = vld [vmem:[#allocation4 + $0x168] sm:$0xff]
    %v140 = vld [vmem:[#allocation4 + $0x170] sm:$0xff]
    %v141 = vld [vmem:[#allocation4 + $0x178] sm:$0xff]
    %v142 = vld [vmem:[#allocation4 + $0x180] sm:$0xff]
    %v143 = vld [vmem:[#allocation4 + $0x188] sm:$0xff]
    %v144 = vld [vmem:[#allocation4 + $0x190] sm:$0xff]
    %v145 = vld [vmem:[#allocation4 + $0x198] sm:$0xff]
    %v146 = vld [vmem:[#allocation4 + $0x1a0] sm:$0xff]
    %v147 = vld [vmem:[#allocation4 + $0x1a8] sm:$0xff]
    %v148 = vld [vmem:[#allocation4 + $0x1b0] sm:$0xff]
    %v149 = vld [vmem:[#allocation4 + $0x1b8] sm:$0xff]
    %v150 = vld [vmem:[#allocation4 + $0x1c0] sm:$0xff]
    %v151 = vld [vmem:[#allocation4 + $0x1c8] sm:$0xff]
    %v152 = vld [vmem:[#allocation4 + $0x1d0] sm:$0xff]
    %v153 = vld [vmem:[#allocation4 + $0x1d8] sm:$0xff]
    %v154 = vld [vmem:[#allocation4 + $0x1e0] sm:$0xff]
    %v155 = vld [vmem:[#allocation4 + $0x1e8] sm:$0xff]
    %v156 = vld [vmem:[#allocation4 + $0x1f0] sm:$0xff]
    %v157 = vld [vmem:[#allocation4 + $0x1f8] sm:$0xff]
    %v158 = vld [vmem:[#allocation4 + $0x200] sm:$0xff]
    %v159 = vld [vmem:[#allocation4 + $0x208] sm:$0xff]
    %v160 = vld [vmem:[#allocation4 + $0x210] sm:$0xff]
    %v161 = vld [vmem:[#allocation4 + $0x218] sm:$0xff]
    %v162 = vld [vmem:[#allocation4 + $0x220] sm:$0xff]
    %v163 = vld [vmem:[#allocation4 + $0x228] sm:$0xff]
    %v164 = vld [vmem:[#allocation4 + $0x230] sm:$0xff]
    %v165 = vld [vmem:[#allocation4 + $0x238] sm:$0xff]
    %v166 = vld [vmem:[#allocation4 + $0x240] sm:$0xff]
    %v167 = vld [vmem:[#allocation4 + $0x248] sm:$0xff]
    %v168 = vld [vmem:[#allocation4 + $0x250] sm:$0xff]
    %v169 = vld [vmem:[#allocation4 + $0x258] sm:$0xff]
    %v170 = vld [vmem:[#allocation4 + $0x260] sm:$0xff]
    %v171 = vld [vmem:[#allocation4 + $0x268] sm:$0xff]
    %v172 = vld [vmem:[#allocation4 + $0x270] sm:$0xff]
    %v173 = vld [vmem:[#allocation4 + $0x278] sm:$0xff]
    %v174 = vld [vmem:[#allocation4 + $0x280] sm:$0xff]
    %v175 = vld [vmem:[#allocation4 + $0x288] sm:$0xff]
    %v176 = vld [vmem:[#allocation4 + $0x290] sm:$0xff]
    %v177 = vld [vmem:[#allocation4 + $0x298] sm:$0xff]
    %v178 = vld [vmem:[#allocation4 + $0x2a0] sm:$0xff]
    %v179 = vld [vmem:[#allocation4 + $0x2a8] sm:$0xff]
    %v180 = vld [vmem:[#allocation4 + $0x2b0] sm:$0xff]
    %v181 = vld [vmem:[#allocation4 + $0x2b8] sm:$0xff]
    %v182 = vld [vmem:[#allocation4 + $0x2c0] sm:$0xff]
    %v183 = vld [vmem:[#allocation4 + $0x2c8] sm:$0xff]
    %v184 = vld [vmem:[#allocation4 + $0x2d0] sm:$0xff]
    %v185 = vld [vmem:[#allocation4 + $0x2d8] sm:$0xff]
    %v186 = vld [vmem:[#allocation4 + $0x2e0] sm:$0xff]
    %v187 = vld [vmem:[#allocation4 + $0x2e8] sm:$0xff]
    %v188 = vld [vmem:[#allocation4 + $0x2f0] sm:$0xff]
    %v189 = vld [vmem:[#allocation4 + $0x2f8] sm:$0xff]
    %v190 = vld [vmem:[#allocation4 + $0x300] sm:$0xff]
    %v191 = vld [vmem:[#allocation4 + $0x308] sm:$0xff]
    %v192 = vld [vmem:[%s2] sm:$0x3]
    %v194 = vlaneseq
    %v195 = vshrl.u32 %v194, 7
    %v196 = vsub.s32 0, %v195
    %v197 = vrot.slane %v192, %v196
    %v198 = vlaneseq
    %v199 = vshrl.u32 %v198, 7
    %v200 = vsub.s32 1, %v199
    %v201 = vrot.slane %v192, %v200
    %v302 = vunpack.c.l.b16 %v94
    %v303 = vunpack.c.h.b16 %v94
    %v304 = vunpack.c.l.b16 %v95
    %v305 = vunpack.c.h.b16 %v95
    %v306 = vunpack.c.l.b16 %v96
    %v307 = vunpack.c.h.b16 %v96
    %v308 = vunpack.c.l.b16 %v97
    %v309 = vunpack.c.h.b16 %v97
    %v310 = vunpack.c.l.b16 %v98
    %v311 = vunpack.c.h.b16 %v98
    %v312 = vunpack.c.l.b16 %v99
    %v313 = vunpack.c.h.b16 %v99
    %v314 = vunpack.c.l.b16 %v100
    %v315 = vunpack.c.h.b16 %v100
    %v316 = vunpack.c.l.b16 %v101
    %v317 = vunpack.c.h.b16 %v101
    %v318 = vunpack.c.l.b16 %v102
    %v319 = vunpack.c.h.b16 %v102
    %v320 = vunpack.c.l.b16 %v103
    %v321 = vunpack.c.h.b16 %v103
    %v322 = vunpack.c.l.b16 %v104
    %v323 = vunpack.c.h.b16 %v104
    %v324 = vunpack.c.l.b16 %v105
    %v325 = vunpack.c.h.b16 %v105
    %v326 = vunpack.c.l.b16 %v106
    %v327 = vunpack.c.h.b16 %v106
    %v328 = vunpack.c.l.b16 %v107
    %v329 = vunpack.c.h.b16 %v107
    %v330 = vunpack.c.l.b16 %v108
    %v331 = vunpack.c.h.b16 %v108
    %v332 = vunpack.c.l.b16 %v109
    %v333 = vunpack.c.h.b16 %v109
    %v334 = vunpack.c.l.b16 %v110
    %v335 = vunpack.c.h.b16 %v110
    %v336 = vunpack.c.l.b16 %v111
    %v337 = vunpack.c.h.b16 %v111
    %v338 = vunpack.c.l.b16 %v112
    %v339 = vunpack.c.h.b16 %v112
    %v340 = vunpack.c.l.b16 %v113
    %v341 = vunpack.c.h.b16 %v113
    %v342 = vunpack.c.l.b16 %v114
    %v343 = vunpack.c.h.b16 %v114
    %v344 = vunpack.c.l.b16 %v115
    %v345 = vunpack.c.h.b16 %v115
    %v346 = vunpack.c.l.b16 %v116
    %v347 = vunpack.c.h.b16 %v116
    %v348 = vunpack.c.l.b16 %v117
    %v349 = vunpack.c.h.b16 %v117
    %v350 = vunpack.c.l.b16 %v118
    %v351 = vunpack.c.h.b16 %v118
    %v352 = vunpack.c.l.b16 %v119
    %v353 = vunpack.c.h.b16 %v119
    %v354 = vunpack.c.l.b16 %v120
    %v355 = vunpack.c.h.b16 %v120
    %v356 = vunpack.c.l.b16 %v121
    %v357 = vunpack.c.h.b16 %v121
    %v358 = vunpack.c.l.b16 %v122
    %v359 = vunpack.c.h.b16 %v122
    %v360 = vunpack.c.l.b16 %v123
    %v361 = vunpack.c.h.b16 %v123
    %v362 = vunpack.c.l.b16 %v124
    %v363 = vunpack.c.h.b16 %v124
    %v364 = vunpack.c.l.b16 %v125
    %v365 = vunpack.c.h.b16 %v125
    %v366 = vunpack.c.l.b16 %v126
    %v367 = vunpack.c.h.b16 %v126
    %v368 = vunpack.c.l.b16 %v127
    %v369 = vunpack.c.h.b16 %v127
    %v370 = vunpack.c.l.b16 %v128
    %v371 = vunpack.c.h.b16 %v128
    %v372 = vunpack.c.l.b16 %v129
    %v373 = vunpack.c.h.b16 %v129
    %v374 = vunpack.c.l.b16 %v130
    %v375 = vunpack.c.h.b16 %v130
    %v376 = vunpack.c.l.b16 %v131
    %v377 = vunpack.c.h.b16 %v131
    %v378 = vunpack.c.l.b16 %v132
    %v379 = vunpack.c.h.b16 %v132
    %v380 = vunpack.c.l.b16 %v133
    %v381 = vunpack.c.h.b16 %v133
    %v382 = vunpack.c.l.b16 %v134
    %v383 = vunpack.c.h.b16 %v134
    %v384 = vunpack.c.l.b16 %v135
    %v385 = vunpack.c.h.b16 %v135
    %v386 = vunpack.c.l.b16 %v136
    %v387 = vunpack.c.h.b16 %v136
    %v388 = vunpack.c.l.b16 %v137
    %v389 = vunpack.c.h.b16 %v137
    %v390 = vunpack.c.l.b16 %v138
    %v391 = vunpack.c.h.b16 %v138
    %v392 = vunpack.c.l.b16 %v139
    %v393 = vunpack.c.h.b16 %v139
    %v394 = vunpack.c.l.b16 %v140
    %v395 = vunpack.c.h.b16 %v140
    %v396 = vunpack.c.l.b16 %v141
    %v397 = vunpack.c.h.b16 %v141
    %v398 = vunpack.c.l.b16 %v142
    %v399 = vunpack.c.h.b16 %v142
    %v400 = vunpack.c.l.b16 %v143
    %v401 = vunpack.c.h.b16 %v143
    %v402 = vunpack.c.l.b16 %v144
    %v403 = vunpack.c.h.b16 %v144
    %v404 = vunpack.c.l.b16 %v145
    %v405 = vunpack.c.h.b16 %v145
    %v406 = vunpack.c.l.b16 %v146
    %v407 = vunpack.c.h.b16 %v146
    %v408 = vunpack.c.l.b16 %v147
    %v409 = vunpack.c.h.b16 %v147
    %v410 = vunpack.c.l.b16 %v148
    %v411 = vunpack.c.h.b16 %v148
    %v412 = vunpack.c.l.b16 %v149
    %v413 = vunpack.c.h.b16 %v149
    %v414 = vunpack.c.l.b16 %v150
    %v415 = vunpack.c.h.b16 %v150
    %v416 = vunpack.c.l.b16 %v151
    %v417 = vunpack.c.h.b16 %v151
    %v418 = vunpack.c.l.b16 %v152
    %v419 = vunpack.c.h.b16 %v152
    %v420 = vunpack.c.l.b16 %v153
    %v421 = vunpack.c.h.b16 %v153
    %v422 = vunpack.c.l.b16 %v154
    %v423 = vunpack.c.h.b16 %v154
    %v424 = vunpack.c.l.b16 %v155
    %v425 = vunpack.c.h.b16 %v155
    %v426 = vunpack.c.l.b16 %v156
    %v427 = vunpack.c.h.b16 %v156
    %v428 = vunpack.c.l.b16 %v157
    %v429 = vunpack.c.h.b16 %v157
    %v430 = vunpack.c.l.b16 %v158
    %v431 = vunpack.c.h.b16 %v158
    %v432 = vunpack.c.l.b16 %v159
    %v433 = vunpack.c.h.b16 %v159
    %v434 = vunpack.c.l.b16 %v160
    %v435 = vunpack.c.h.b16 %v160
    %v436 = vunpack.c.l.b16 %v161
    %v437 = vunpack.c.h.b16 %v161
    %v438 = vunpack.c.l.b16 %v162
    %v439 = vunpack.c.h.b16 %v162
    %v440 = vunpack.c.l.b16 %v163
    %v441 = vunpack.c.h.b16 %v163
    %v442 = vunpack.c.l.b16 %v164
    %v443 = vunpack.c.h.b16 %v164
    %v444 = vunpack.c.l.b16 %v165
    %v445 = vunpack.c.h.b16 %v165
    %v446 = vunpack.c.l.b16 %v166
    %v447 = vunpack.c.h.b16 %v166
    %v448 = vunpack.c.l.b16 %v167
    %v449 = vunpack.c.h.b16 %v167
    %v450 = vunpack.c.l.b16 %v168
    %v451 = vunpack.c.h.b16 %v168
    %v452 = vunpack.c.l.b16 %v169
    %v453 = vunpack.c.h.b16 %v169
    %v454 = vunpack.c.l.b16 %v170
    %v455 = vunpack.c.h.b16 %v170
    %v456 = vunpack.c.l.b16 %v171
    %v457 = vunpack.c.h.b16 %v171
    %v458 = vunpack.c.l.b16 %v172
    %v459 = vunpack.c.h.b16 %v172
    %v460 = vunpack.c.l.b16 %v173
    %v461 = vunpack.c.h.b16 %v173
    %v462 = vunpack.c.l.b16 %v174
    %v463 = vunpack.c.h.b16 %v174
    %v464 = vunpack.c.l.b16 %v175
    %v465 = vunpack.c.h.b16 %v175
    %v466 = vunpack.c.l.b16 %v176
    %v467 = vunpack.c.h.b16 %v176
    %v468 = vunpack.c.l.b16 %v177
    %v469 = vunpack.c.h.b16 %v177
    %v470 = vunpack.c.l.b16 %v178
    %v471 = vunpack.c.h.b16 %v178
    %v472 = vunpack.c.l.b16 %v179
    %v473 = vunpack.c.h.b16 %v179
    %v474 = vunpack.c.l.b16 %v180
    %v475 = vunpack.c.h.b16 %v180
    %v476 = vunpack.c.l.b16 %v181
    %v477 = vunpack.c.h.b16 %v181
    %v478 = vunpack.c.l.b16 %v182
    %v479 = vunpack.c.h.b16 %v182
    %v480 = vunpack.c.l.b16 %v183
    %v481 = vunpack.c.h.b16 %v183
    %v482 = vunpack.c.l.b16 %v184
    %v483 = vunpack.c.h.b16 %v184
    %v484 = vunpack.c.l.b16 %v185
    %v485 = vunpack.c.h.b16 %v185
    %v486 = vunpack.c.l.b16 %v186
    %v487 = vunpack.c.h.b16 %v186
    %v488 = vunpack.c.l.b16 %v187
    %v489 = vunpack.c.h.b16 %v187
    %v490 = vunpack.c.l.b16 %v188
    %v491 = vunpack.c.h.b16 %v188
    %v492 = vunpack.c.l.b16 %v189
    %v493 = vunpack.c.h.b16 %v189
    %v494 = vunpack.c.l.b16 %v190
    %v495 = vunpack.c.h.b16 %v190
    %v496 = vunpack.c.l.b16 %v191
    %v497 = vunpack.c.h.b16 %v191
    %v498 = vpack.c.b16 %v304, %v302
    %v499 = vpack.c.b16 %v305, %v303
    %v500 = vpack.c.b16 %v308, %v306
    %v501 = vpack.c.b16 %v309, %v307
    %v502 = vpack.c.b16 %v312, %v310
    %v503 = vpack.c.b16 %v313, %v311
    %v504 = vpack.c.b16 %v316, %v314
    %v505 = vpack.c.b16 %v317, %v315
    %v506 = vpack.c.b16 %v320, %v318
    %v507 = vpack.c.b16 %v321, %v319
    %v508 = vpack.c.b16 %v324, %v322
    %v509 = vpack.c.b16 %v325, %v323
    %v510 = vpack.c.b16 %v328, %v326
    %v511 = vpack.c.b16 %v329, %v327
    %v512 = vpack.c.b16 %v332, %v330
    %v513 = vpack.c.b16 %v333, %v331
    %v514 = vpack.c.b16 %v336, %v334
    %v515 = vpack.c.b16 %v337, %v335
    %v516 = vpack.c.b16 %v340, %v338
    %v517 = vpack.c.b16 %v341, %v339
    %v518 = vpack.c.b16 %v344, %v342
    %v519 = vpack.c.b16 %v345, %v343
    %v520 = vpack.c.b16 %v348, %v346
    %v521 = vpack.c.b16 %v349, %v347
    %v522 = vpack.c.b16 %v352, %v350
    %v523 = vpack.c.b16 %v353, %v351
    %v524 = vpack.c.b16 %v356, %v354
    %v525 = vpack.c.b16 %v357, %v355
    %v526 = vpack.c.b16 %v360, %v358
    %v527 = vpack.c.b16 %v361, %v359
    %v528 = vpack.c.b16 %v364, %v362
    %v529 = vpack.c.b16 %v365, %v363
    %v530 = vpack.c.b16 %v368, %v366
    %v531 = vpack.c.b16 %v369, %v367
    %v532 = vpack.c.b16 %v372, %v370
    %v533 = vpack.c.b16 %v373, %v371
    %v534 = vpack.c.b16 %v376, %v374
    %v535 = vpack.c.b16 %v377, %v375
    %v536 = vpack.c.b16 %v380, %v378
    %v537 = vpack.c.b16 %v381, %v379
    %v538 = vpack.c.b16 %v384, %v382
    %v539 = vpack.c.b16 %v385, %v383
    %v540 = vpack.c.b16 %v388, %v386
    %v541 = vpack.c.b16 %v389, %v387
    %v542 = vpack.c.b16 %v392, %v390
    %v543 = vpack.c.b16 %v393, %v391
    %v544 = vpack.c.b16 %v396, %v394
    %v545 = vpack.c.b16 %v397, %v395
    %v546 = vpack.c.b16 %v400, %v398
    %v547 = vpack.c.b16 %v401, %v399
    %v548 = vpack.c.b16 %v404, %v402
    %v549 = vpack.c.b16 %v405, %v403
    %v550 = vpack.c.b16 %v408, %v406
    %v551 = vpack.c.b16 %v409, %v407
    %v552 = vpack.c.b16 %v412, %v410
    %v553 = vpack.c.b16 %v413, %v411
    %v554 = vpack.c.b16 %v416, %v414
    %v555 = vpack.c.b16 %v417, %v415
    %v556 = vpack.c.b16 %v420, %v418
    %v557 = vpack.c.b16 %v421, %v419
    %v558 = vpack.c.b16 %v424, %v422
    %v559 = vpack.c.b16 %v425, %v423
    %v560 = vpack.c.b16 %v428, %v426
    %v561 = vpack.c.b16 %v429, %v427
    %v562 = vpack.c.b16 %v432, %v430
    %v563 = vpack.c.b16 %v433, %v431
    %v564 = vpack.c.b16 %v436, %v434
    %v565 = vpack.c.b16 %v437, %v435
    %v566 = vpack.c.b16 %v440, %v438
    %v567 = vpack.c.b16 %v441, %v439
    %v568 = vpack.c.b16 %v444, %v442
    %v569 = vpack.c.b16 %v445, %v443
    %v570 = vpack.c.b16 %v448, %v446
    %v571 = vpack.c.b16 %v449, %v447
    %v572 = vpack.c.b16 %v452, %v450
    %v573 = vpack.c.b16 %v453, %v451
    %v574 = vpack.c.b16 %v456, %v454
    %v575 = vpack.c.b16 %v457, %v455
    %v576 = vpack.c.b16 %v460, %v458
    %v577 = vpack.c.b16 %v461, %v459
    %v578 = vpack.c.b16 %v464, %v462
    %v579 = vpack.c.b16 %v465, %v463
    %v580 = vpack.c.b16 %v468, %v466
    %v581 = vpack.c.b16 %v469, %v467
    %v582 = vpack.c.b16 %v472, %v470
    %v583 = vpack.c.b16 %v473, %v471
    %v584 = vpack.c.b16 %v476, %v474
    %v585 = vpack.c.b16 %v477, %v475
    %v586 = vpack.c.b16 %v480, %v478
    %v587 = vpack.c.b16 %v481, %v479
    %v588 = vpack.c.b16 %v484, %v482
    %v589 = vpack.c.b16 %v485, %v483
    %v590 = vpack.c.b16 %v488, %v486
    %v591 = vpack.c.b16 %v489, %v487
    %v592 = vpack.c.b16 %v492, %v490
    %v593 = vpack.c.b16 %v493, %v491
    %v594 = vpack.c.b16 %v496, %v494
    %v595 = vpack.c.b16 %v497, %v495
    %vm694 = vcmask 130048
    %v696 = vsel %vm694, %v93, 0
    %698 = vmatprep.subr.bf16.mxu0 %v499
    %699 = vmatpush1.bf16.msra.mxu0 %v498
    %700 = vmatprep.subr.bf16.mxu0 %v501
    %701 = vmatpush1.bf16.msra.mxu0 %v500
    %702 = vmatprep.subr.bf16.mxu0 %v503
    %703 = vmatpush1.bf16.msra.mxu0 %v502
    %704 = vmatprep.subr.bf16.mxu0 %v505
    %705 = vmatpush1.bf16.msra.mxu0 %v504
    %706 = vmatprep.subr.bf16.mxu0 %v507
    %707 = vmatpush1.bf16.msra.mxu0 %v506
    %708 = vmatprep.subr.bf16.mxu0 %v509
    %709 = vmatpush1.bf16.msra.mxu0 %v508
    %710 = vmatprep.subr.bf16.mxu0 %v511
    %711 = vmatpush1.bf16.msra.mxu0 %v510
    %712 = vmatprep.subr.bf16.mxu0 %v513
    %713 = vmatpush1.bf16.msra.mxu0 %v512
    %714 = vmatprep.subr.bf16.mxu0 %v515
    %715 = vmatpush1.bf16.msra.mxu0 %v514
    %716 = vmatprep.subr.bf16.mxu0 %v517
    %717 = vmatpush1.bf16.msra.mxu0 %v516
    %718 = vmatprep.subr.bf16.mxu0 %v519
    %719 = vmatpush1.bf16.msra.mxu0 %v518
    %720 = vmatprep.subr.bf16.mxu0 %v521
    %721 = vmatpush1.bf16.msra.mxu0 %v520
    %722 = vmatprep.subr.bf16.mxu0 %v523
    %723 = vmatpush1.bf16.msra.mxu0 %v522
    %724 = vmatprep.subr.bf16.mxu0 %v525
    %725 = vmatpush1.bf16.msra.mxu0 %v524
    %726 = vmatprep.subr.bf16.mxu0 %v527
    %727 = vmatpush1.bf16.msra.mxu0 %v526
    %728 = vmatprep.subr.bf16.mxu0 %v529
    %729 = vmatpush1.bf16.msra.mxu0 %v528
    %730 = vmatprep.mubr.bf16.mxu0 %v88
    %731 = vmatmul.mubr.bf16.gmra.mrb[0].mxu0 %v87
    %v732 = vpop.f32.mrb[0].mxu0
    %v733 = vadd.f32 %v197, %v732
    %v734 = vpop.f32.mrb[0].mxu0
    %v735 = vadd.f32 %v201, %v734
    %v736 = vpop.f32.mrb[0].mxu0
    %v737 = vpop.f32.mrb[0].mxu0
    %738 = vdwg.mxu0
    %739 = vmatprep.subr.bf16.mxu0 %v531
    %740 = vmatpush1.bf16.msra.mxu0 %v530
    %741 = vmatprep.subr.bf16.mxu0 %v533
    %742 = vmatpush1.bf16.msra.mxu0 %v532
    %743 = vmatprep.subr.bf16.mxu0 %v535
    %744 = vmatpush1.bf16.msra.mxu0 %v534
    %745 = vmatprep.subr.bf16.mxu0 %v537
    %746 = vmatpush1.bf16.msra.mxu0 %v536
    %747 = vmatprep.subr.bf16.mxu0 %v539
    %748 = vmatpush1.bf16.msra.mxu0 %v538
    %749 = vmatprep.subr.bf16.mxu0 %v541
    %750 = vmatpush1.bf16.msra.mxu0 %v540
    %751 = vmatprep.subr.bf16.mxu0 %v543
    %752 = vmatpush1.bf16.msra.mxu0 %v542
    %753 = vmatprep.subr.bf16.mxu0 %v545
    %754 = vmatpush1.bf16.msra.mxu0 %v544
    %755 = vmatprep.subr.bf16.mxu0 %v547
    %756 = vmatpush1.bf16.msra.mxu0 %v546
    %757 = vmatprep.subr.bf16.mxu0 %v549
    %758 = vmatpush1.bf16.msra.mxu0 %v548
    %759 = vmatprep.subr.bf16.mxu0 %v551
    %760 = vmatpush1.bf16.msra.mxu0 %v550
    %761 = vmatprep.subr.bf16.mxu0 %v553
    %762 = vmatpush1.bf16.msra.mxu0 %v552
    %763 = vmatprep.subr.bf16.mxu0 %v555
    %764 = vmatpush1.bf16.msra.mxu0 %v554
    %765 = vmatprep.subr.bf16.mxu0 %v557
    %766 = vmatpush1.bf16.msra.mxu0 %v556
    %767 = vmatprep.subr.bf16.mxu0 %v559
    %768 = vmatpush1.bf16.msra.mxu0 %v558
    %769 = vmatprep.subr.bf16.mxu0 %v561
    %770 = vmatpush1.bf16.msra.mxu0 %v560
    %771 = vmatprep.mubr.bf16.mxu0 %v90
    %772 = vmatmul.mubr.bf16.gmra.mrb[0].mxu0 %v89
    %v773 = vpop.f32.mrb[0].mxu0
    %v774 = vadd.f32 %v733, %v773
    %v775 = vpop.f32.mrb[0].mxu0
    %v776 = vadd.f32 %v735, %v775
    %v777 = vpop.f32.mrb[0].mxu0
    %v778 = vpop.f32.mrb[0].mxu0
    %779 = vdwg.mxu0
    %780 = vmatprep.subr.bf16.mxu0 %v563
    %781 = vmatpush1.bf16.msra.mxu0 %v562
    %782 = vmatprep.subr.bf16.mxu0 %v565
    %783 = vmatpush1.bf16.msra.mxu0 %v564
    %784 = vmatprep.subr.bf16.mxu0 %v567
    %785 = vmatpush1.bf16.msra.mxu0 %v566
    %786 = vmatprep.subr.bf16.mxu0 %v569
    %787 = vmatpush1.bf16.msra.mxu0 %v568
    %788 = vmatprep.subr.bf16.mxu0 %v571
    %789 = vmatpush1.bf16.msra.mxu0 %v570
    %790 = vmatprep.subr.bf16.mxu0 %v573
    %791 = vmatpush1.bf16.msra.mxu0 %v572
    %792 = vmatprep.subr.bf16.mxu0 %v575
    %793 = vmatpush1.bf16.msra.mxu0 %v574
    %794 = vmatprep.subr.bf16.mxu0 %v577
    %795 = vmatpush1.bf16.msra.mxu0 %v576
    %796 = vmatprep.subr.bf16.mxu0 %v579
    %797 = vmatpush1.bf16.msra.mxu0 %v578
    %798 = vmatprep.subr.bf16.mxu0 %v581
    %799 = vmatpush1.bf16.msra.mxu0 %v580
    %800 = vmatprep.subr.bf16.mxu0 %v583
    %801 = vmatpush1.bf16.msra.mxu0 %v582
    %802 = vmatprep.subr.bf16.mxu0 %v585
    %803 = vmatpush1.bf16.msra.mxu0 %v584
    %804 = vmatprep.subr.bf16.mxu0 %v587
    %805 = vmatpush1.bf16.msra.mxu0 %v586
    %806 = vmatprep.subr.bf16.mxu0 %v589
    %807 = vmatpush1.bf16.msra.mxu0 %v588
    %808 = vmatprep.subr.bf16.mxu0 %v591
    %809 = vmatpush1.bf16.msra.mxu0 %v590
    %810 = vmatprep.subr.bf16.mxu0 %v593
    %811 = vmatpush1.bf16.msra.mxu0 %v592
    %812 = vmatprep.mubr.bf16.mxu0 %v92
    %813 = vmatmul.mubr.bf16.gmra.mrb[0].mxu0 %v91
    %v814 = vpop.f32.mrb[0].mxu0
    %v815 = vadd.f32 %v774, %v814
    %v816 = vpop.f32.mrb[0].mxu0
    %v817 = vadd.f32 %v776, %v816
    %v818 = vpop.f32.mrb[0].mxu0
    %v819 = vpop.f32.mrb[0].mxu0
    %820 = vdwg.mxu0
    %821 = vmatprep.subr.bf16.mxu0 %v595
    %822 = vmatpush1.bf16.msra.mxu0 %v594
    %823 = vmatprep.subr.bf16.mxu0 0
    %824 = vmatpush1.bf16.msra.mxu0 0
    %825 = vmatprep.subr.bf16.mxu0 0
    %826 = vmatpush1.bf16.msra.mxu0 0
    %827 = vmatprep.subr.bf16.mxu0 0
    %828 = vmatpush1.bf16.msra.mxu0 0
    %829 = vmatprep.subr.bf16.mxu0 0
    %830 = vmatpush1.bf16.msra.mxu0 0
    %831 = vmatprep.subr.bf16.mxu0 0
    %832 = vmatpush1.bf16.msra.mxu0 0
    %833 = vmatprep.subr.bf16.mxu0 0
    %834 = vmatpush1.bf16.msra.mxu0 0
    %835 = vmatprep.subr.bf16.mxu0 0
    %836 = vmatpush1.bf16.msra.mxu0 0
    %837 = vmatprep.subr.bf16.mxu0 0
    %838 = vmatpush1.bf16.msra.mxu0 0
    %839 = vmatprep.subr.bf16.mxu0 0
    %840 = vmatpush1.bf16.msra.mxu0 0
    %841 = vmatprep.subr.bf16.mxu0 0
    %842 = vmatpush1.bf16.msra.mxu0 0
    %843 = vmatprep.subr.bf16.mxu0 0
    %844 = vmatpush1.bf16.msra.mxu0 0
    %845 = vmatprep.subr.bf16.mxu0 0
    %846 = vmatpush1.bf16.msra.mxu0 0
    %847 = vmatprep.subr.bf16.mxu0 0
    %848 = vmatpush1.bf16.msra.mxu0 0
    %849 = vmatprep.subr.bf16.mxu0 0
    %850 = vmatpush1.bf16.msra.mxu0 0
    %851 = vmatprep.subr.bf16.mxu0 0
    %852 = vmatpush1.bf16.msra.mxu0 0
    %853 = vmatprep.mubr.bf16.mxu0 0
    %854 = vmatmul.mubr.bf16.gmra.mrb[0].mxu0 %v696
    %v855 = vpop.f32.mrb[0].mxu0
    %v856 = vadd.f32 %v815, %v855
    %v857 = vpop.f32.mrb[0].mxu0
    %v858 = vadd.f32 %v817, %v857
    %v859 = vpop.f32.mrb[0].mxu0
    %v860 = vpop.f32.mrb[0].mxu0
    %861 = vdwg.mxu0
    %v862 = vmax.f32 %v856, 0.0
    %v863 = vmax.f32 %v858, 0.0
    %v864 = vpack.c.bf16 %v862, %v862
    %v865 = vpack.c.bf16 %v863, %v863
    %v866 = vld [vmem:[#allocation6] sm:$0xff]
    %v867 = vld [vmem:[#allocation6 + $0x8] sm:$0xff]
    %v868 = vld [vmem:[#allocation6 + $0x10] sm:$0xff]
    %v869 = vld [vmem:[#allocation6 + $0x18] sm:$0xff]
    %v870 = vld [vmem:[#allocation6 + $0x20] sm:$0xff]
    %v871 = vld [vmem:[#allocation6 + $0x28] sm:$0xff]
    %v872 = vld [vmem:[#allocation6 + $0x30] sm:$0xff]
    %v873 = vld [vmem:[#allocation6 + $0x38] sm:$0xff]
    %v874 = vld [vmem:[#allocation6 + $0x40] sm:$0xff]
    %v875 = vld [vmem:[#allocation6 + $0x48] sm:$0xff]
    %v876 = vld [vmem:[#allocation6 + $0x50] sm:$0xff]
    %v877 = vld [vmem:[#allocation6 + $0x58] sm:$0xff]
    %v878 = vld [vmem:[#allocation6 + $0x60] sm:$0xff]
    %v879 = vld [vmem:[#allocation6 + $0x68] sm:$0xff]
    %v880 = vld [vmem:[#allocation6 + $0x70] sm:$0xff]
    %v881 = vld [vmem:[#allocation6 + $0x78] sm:$0xff]
    %v882 = vld [vmem:[#allocation6 + $0x80] sm:$0xff]
    %v883 = vld [vmem:[#allocation6 + $0x88] sm:$0xff]
    %v884 = vld [vmem:[#allocation6 + $0x90] sm:$0xff]
    %v885 = vld [vmem:[#allocation6 + $0x98] sm:$0xff]
    %v886 = vld [vmem:[#allocation6 + $0xa0] sm:$0xff]
    %v887 = vld [vmem:[#allocation6 + $0xa8] sm:$0xff]
    %v888 = vld [vmem:[#allocation6 + $0xb0] sm:$0xff]
    %v889 = vld [vmem:[#allocation6 + $0xb8] sm:$0xff]
    %v890 = vld [vmem:[#allocation6 + $0xc0] sm:$0xff]
    %v891 = vld [vmem:[#allocation6 + $0xc8] sm:$0xff]
    %v892 = vld [vmem:[#allocation6 + $0xd0] sm:$0xff]
    %v893 = vld [vmem:[#allocation6 + $0xd8] sm:$0xff]
    %v894 = vld [vmem:[#allocation6 + $0xe0] sm:$0xff]
    %v895 = vld [vmem:[#allocation6 + $0xe8] sm:$0xff]
    %v896 = vld [vmem:[#allocation6 + $0xf0] sm:$0xff]
    %v897 = vld [vmem:[#allocation6 + $0xf8] sm:$0xff]
    %v898 = vld [vmem:[%s4] sm:$0x3]
    %v900 = vlaneseq
    %v901 = vshrl.u32 %v900, 7
    %v902 = vsub.s32 0, %v901
    %v903 = vrot.slane %v898, %v902
    %v904 = vlaneseq
    %v905 = vshrl.u32 %v904, 7
    %v906 = vsub.s32 1, %v905
    %v907 = vrot.slane %v898, %v906
    %v942 = vunpack.c.l.b16 %v866
    %v943 = vunpack.c.h.b16 %v866
    %v944 = vunpack.c.l.b16 %v867
    %v945 = vunpack.c.h.b16 %v867
    %v946 = vunpack.c.l.b16 %v868
    %v947 = vunpack.c.h.b16 %v868
    %v948 = vunpack.c.l.b16 %v869
    %v949 = vunpack.c.h.b16 %v869
    %v950 = vunpack.c.l.b16 %v870
    %v951 = vunpack.c.h.b16 %v870
    %v952 = vunpack.c.l.b16 %v871
    %v953 = vunpack.c.h.b16 %v871
    %v954 = vunpack.c.l.b16 %v872
    %v955 = vunpack.c.h.b16 %v872
    %v956 = vunpack.c.l.b16 %v873
    %v957 = vunpack.c.h.b16 %v873
    %v958 = vunpack.c.l.b16 %v874
    %v959 = vunpack.c.h.b16 %v874
    %v960 = vunpack.c.l.b16 %v875
    %v961 = vunpack.c.h.b16 %v875
    %v962 = vunpack.c.l.b16 %v876
    %v963 = vunpack.c.h.b16 %v876
    %v964 = vunpack.c.l.b16 %v877
    %v965 = vunpack.c.h.b16 %v877
    %v966 = vunpack.c.l.b16 %v878
    %v967 = vunpack.c.h.b16 %v878
    %v968 = vunpack.c.l.b16 %v879
    %v969 = vunpack.c.h.b16 %v879
    %v970 = vunpack.c.l.b16 %v880
    %v971 = vunpack.c.h.b16 %v880
    %v972 = vunpack.c.l.b16 %v881
    %v973 = vunpack.c.h.b16 %v881
    %v974 = vunpack.c.l.b16 %v882
    %v975 = vunpack.c.h.b16 %v882
    %v976 = vunpack.c.l.b16 %v883
    %v977 = vunpack.c.h.b16 %v883
    %v978 = vunpack.c.l.b16 %v884
    %v979 = vunpack.c.h.b16 %v884
    %v980 = vunpack.c.l.b16 %v885
    %v981 = vunpack.c.h.b16 %v885
    %v982 = vunpack.c.l.b16 %v886
    %v983 = vunpack.c.h.b16 %v886
    %v984 = vunpack.c.l.b16 %v887
    %v985 = vunpack.c.h.b16 %v887
    %v986 = vunpack.c.l.b16 %v888
    %v987 = vunpack.c.h.b16 %v888
    %v988 = vunpack.c.l.b16 %v889
    %v989 = vunpack.c.h.b16 %v889
    %v990 = vunpack.c.l.b16 %v890
    %v991 = vunpack.c.h.b16 %v890
    %v992 = vunpack.c.l.b16 %v891
    %v993 = vunpack.c.h.b16 %v891
    %v994 = vunpack.c.l.b16 %v892
    %v995 = vunpack.c.h.b16 %v892
    %v996 = vunpack.c.l.b16 %v893
    %v997 = vunpack.c.h.b16 %v893
    %v998 = vunpack.c.l.b16 %v894
    %v999 = vunpack.c.h.b16 %v894
    %v1000 = vunpack.c.l.b16 %v895
    %v1001 = vunpack.c.h.b16 %v895
    %v1002 = vunpack.c.l.b16 %v896
    %v1003 = vunpack.c.h.b16 %v896
    %v1004 = vunpack.c.l.b16 %v897
    %v1005 = vunpack.c.h.b16 %v897
    %v1006 = vpack.c.b16 %v944, %v942
    %v1007 = vpack.c.b16 %v945, %v943
    %v1008 = vpack.c.b16 %v948, %v946
    %v1009 = vpack.c.b16 %v949, %v947
    %v1010 = vpack.c.b16 %v952, %v950
    %v1011 = vpack.c.b16 %v953, %v951
    %v1012 = vpack.c.b16 %v956, %v954
    %v1013 = vpack.c.b16 %v957, %v955
    %v1014 = vpack.c.b16 %v960, %v958
    %v1015 = vpack.c.b16 %v961, %v959
    %v1016 = vpack.c.b16 %v964, %v962
    %v1017 = vpack.c.b16 %v965, %v963
    %v1018 = vpack.c.b16 %v968, %v966
    %v1019 = vpack.c.b16 %v969, %v967
    %v1020 = vpack.c.b16 %v972, %v970
    %v1021 = vpack.c.b16 %v973, %v971
    %v1022 = vpack.c.b16 %v976, %v974
    %v1023 = vpack.c.b16 %v977, %v975
    %v1024 = vpack.c.b16 %v980, %v978
    %v1025 = vpack.c.b16 %v981, %v979
    %v1026 = vpack.c.b16 %v984, %v982
    %v1027 = vpack.c.b16 %v985, %v983
    %v1028 = vpack.c.b16 %v988, %v986
    %v1029 = vpack.c.b16 %v989, %v987
    %v1030 = vpack.c.b16 %v992, %v990
    %v1031 = vpack.c.b16 %v993, %v991
    %v1032 = vpack.c.b16 %v996, %v994
    %v1033 = vpack.c.b16 %v997, %v995
    %v1034 = vpack.c.b16 %v1000, %v998
    %v1035 = vpack.c.b16 %v1001, %v999
    %v1036 = vpack.c.b16 %v1004, %v1002
    %v1037 = vpack.c.b16 %v1005, %v1003
    %1070 = vmatprep.subr.bf16.mxu0 %v1007
    %1071 = vmatpush1.bf16.msra.mxu0 %v1006
    %1072 = vmatprep.subr.bf16.mxu0 %v1009
    %1073 = vmatpush1.bf16.msra.mxu0 %v1008
    %1074 = vmatprep.subr.bf16.mxu0 %v1011
    %1075 = vmatpush1.bf16.msra.mxu0 %v1010
    %1076 = vmatprep.subr.bf16.mxu0 %v1013
    %1077 = vmatpush1.bf16.msra.mxu0 %v1012
    %1078 = vmatprep.subr.bf16.mxu0 %v1015
    %1079 = vmatpush1.bf16.msra.mxu0 %v1014
    %1080 = vmatprep.subr.bf16.mxu0 %v1017
    %1081 = vmatpush1.bf16.msra.mxu0 %v1016
    %1082 = vmatprep.subr.bf16.mxu0 %v1019
    %1083 = vmatpush1.bf16.msra.mxu0 %v1018
    %1084 = vmatprep.subr.bf16.mxu0 %v1021
    %1085 = vmatpush1.bf16.msra.mxu0 %v1020
    %1086 = vmatprep.subr.bf16.mxu0 %v1023
    %1087 = vmatpush1.bf16.msra.mxu0 %v1022
    %1088 = vmatprep.subr.bf16.mxu0 %v1025
    %1089 = vmatpush1.bf16.msra.mxu0 %v1024
    %1090 = vmatprep.subr.bf16.mxu0 %v1027
    %1091 = vmatpush1.bf16.msra.mxu0 %v1026
    %1092 = vmatprep.subr.bf16.mxu0 %v1029
    %1093 = vmatpush1.bf16.msra.mxu0 %v1028
    %1094 = vmatprep.subr.bf16.mxu0 %v1031
    %1095 = vmatpush1.bf16.msra.mxu0 %v1030
    %1096 = vmatprep.subr.bf16.mxu0 %v1033
    %1097 = vmatpush1.bf16.msra.mxu0 %v1032
    %1098 = vmatprep.subr.bf16.mxu0 %v1035
    %1099 = vmatpush1.bf16.msra.mxu0 %v1034
    %1100 = vmatprep.subr.bf16.mxu0 %v1037
    %1101 = vmatpush1.bf16.msra.mxu0 %v1036
    %1102 = vmatprep.mubr.bf16.mxu0 %v865
    %1103 = vmatmul.mubr.bf16.gmra.mrb[0].mxu0 %v864
    %v1104 = vpop.f32.mrb[0].mxu0
    %v1105 = vadd.f32 %v903, %v1104
    %v1106 = vpop.f32.mrb[0].mxu0
    %v1107 = vadd.f32 %v907, %v1106
    %v1108 = vpop.f32.mrb[0].mxu0
    %v1109 = vpop.f32.mrb[0].mxu0
    %1110 = vdwg.mxu0
    %v1111 = vmax.f32 %v1105, 0.0
    %v1112 = vmax.f32 %v1107, 0.0
    %v1113 = vpack.c.bf16 %v1111, %v1111
    %v1114 = vpack.c.bf16 %v1112, %v1112
    %v1115 = vld [vmem:[#allocation7] sm:$0xf]
    %v1116 = vld [vmem:[#allocation7 + $0x4] sm:$0xf]
    %v1117 = vld [vmem:[#allocation7 + $0x8] sm:$0xf]
    %v1118 = vld [vmem:[#allocation7 + $0xc] sm:$0xf]
    %v1119 = vld [vmem:[#allocation7 + $0x10] sm:$0xf]
    %v1120 = vld [vmem:[#allocation7 + $0x14] sm:$0xf]
    %v1121 = vld [vmem:[#allocation7 + $0x18] sm:$0xf]
    %v1122 = vld [vmem:[#allocation7 + $0x1c] sm:$0xf]
    %v1123 = vld [vmem:[#allocation7 + $0x20] sm:$0xf]
    %v1124 = vld [vmem:[#allocation7 + $0x24] sm:$0xf]
    %v1125 = vld [vmem:[#allocation7 + $0x28] sm:$0xf]
    %v1126 = vld [vmem:[#allocation7 + $0x2c] sm:$0xf]
    %v1127 = vld [vmem:[#allocation7 + $0x30] sm:$0xf]
    %v1128 = vld [vmem:[#allocation7 + $0x34] sm:$0xf]
    %v1129 = vld [vmem:[#allocation7 + $0x38] sm:$0xf]
    %v1130 = vld [vmem:[#allocation7 + $0x3c] sm:$0xf]
    %v1131 = vld [vmem:[#allocation7 + $0x40] sm:$0xf]
    %v1132 = vld [vmem:[#allocation7 + $0x44] sm:$0xf]
    %v1133 = vld [vmem:[#allocation7 + $0x48] sm:$0xf]
    %v1134 = vld [vmem:[#allocation7 + $0x4c] sm:$0xf]
    %v1135 = vld [vmem:[#allocation7 + $0x50] sm:$0xf]
    %v1136 = vld [vmem:[#allocation7 + $0x54] sm:$0xf]
    %v1137 = vld [vmem:[#allocation7 + $0x58] sm:$0xf]
    %v1138 = vld [vmem:[#allocation7 + $0x5c] sm:$0xf]
    %v1139 = vld [vmem:[#allocation7 + $0x60] sm:$0xf]
    %v1140 = vld [vmem:[#allocation7 + $0x64] sm:$0xf]
    %v1141 = vld [vmem:[#allocation7 + $0x68] sm:$0xf]
    %v1142 = vld [vmem:[#allocation7 + $0x6c] sm:$0xf]
    %v1143 = vld [vmem:[#allocation7 + $0x70] sm:$0xf]
    %v1144 = vld [vmem:[#allocation7 + $0x74] sm:$0xf]
    %v1145 = vld [vmem:[#allocation7 + $0x78] sm:$0xf]
    %v1146 = vld [vmem:[#allocation7 + $0x7c] sm:$0xf]
    %v1147 = vld [vmem:[%s6] sm:$0x1]
    %v1149 = vlaneseq
    %v1150 = vshrl.u32 %v1149, 7
    %v1151 = vsub.s32 0, %v1150
    %v1152 = vrot.slane %v1147, %v1151
    %v1186 = vunpack.c.l.b16 %v1115
    %v1187 = vunpack.c.l.b16 %v1116
    %v1188 = vunpack.c.l.b16 %v1117
    %v1189 = vunpack.c.l.b16 %v1118
    %v1190 = vunpack.c.l.b16 %v1119
    %v1191 = vunpack.c.l.b16 %v1120
    %v1192 = vunpack.c.l.b16 %v1121
    %v1193 = vunpack.c.l.b16 %v1122
    %v1194 = vunpack.c.l.b16 %v1123
    %v1195 = vunpack.c.l.b16 %v1124
    %v1196 = vunpack.c.l.b16 %v1125
    %v1197 = vunpack.c.l.b16 %v1126
    %v1198 = vunpack.c.l.b16 %v1127
    %v1199 = vunpack.c.l.b16 %v1128
    %v1200 = vunpack.c.l.b16 %v1129
    %v1201 = vunpack.c.l.b16 %v1130
    %v1202 = vunpack.c.l.b16 %v1131
    %v1203 = vunpack.c.l.b16 %v1132
    %v1204 = vunpack.c.l.b16 %v1133
    %v1205 = vunpack.c.l.b16 %v1134
    %v1206 = vunpack.c.l.b16 %v1135
    %v1207 = vunpack.c.l.b16 %v1136
    %v1208 = vunpack.c.l.b16 %v1137
    %v1209 = vunpack.c.l.b16 %v1138
    %v1210 = vunpack.c.l.b16 %v1139
    %v1211 = vunpack.c.l.b16 %v1140
    %v1212 = vunpack.c.l.b16 %v1141
    %v1213 = vunpack.c.l.b16 %v1142
    %v1214 = vunpack.c.l.b16 %v1143
    %v1215 = vunpack.c.l.b16 %v1144
    %v1216 = vunpack.c.l.b16 %v1145
    %v1217 = vunpack.c.l.b16 %v1146
    %v1218 = vpack.c.b16 %v1187, %v1186
    %v1219 = vpack.c.b16 %v1189, %v1188
    %v1220 = vpack.c.b16 %v1191, %v1190
    %v1221 = vpack.c.b16 %v1193, %v1192
    %v1222 = vpack.c.b16 %v1195, %v1194
    %v1223 = vpack.c.b16 %v1197, %v1196
    %v1224 = vpack.c.b16 %v1199, %v1198
    %v1225 = vpack.c.b16 %v1201, %v1200
    %v1226 = vpack.c.b16 %v1203, %v1202
    %v1227 = vpack.c.b16 %v1205, %v1204
    %v1228 = vpack.c.b16 %v1207, %v1206
    %v1229 = vpack.c.b16 %v1209, %v1208
    %v1230 = vpack.c.b16 %v1211, %v1210
    %v1231 = vpack.c.b16 %v1213, %v1212
    %v1232 = vpack.c.b16 %v1215, %v1214
    %v1233 = vpack.c.b16 %v1217, %v1216
    %1250 = vmatprep.subr.bf16.mxu0 0
    %1251 = vmatpush1.bf16.msra.mxu0 %v1218
    %1252 = vmatprep.subr.bf16.mxu0 0
    %1253 = vmatpush1.bf16.msra.mxu0 %v1219
    %1254 = vmatprep.subr.bf16.mxu0 0
    %1255 = vmatpush1.bf16.msra.mxu0 %v1220
    %1256 = vmatprep.subr.bf16.mxu0 0
    %1257 = vmatpush1.bf16.msra.mxu0 %v1221
    %1258 = vmatprep.subr.bf16.mxu0 0
    %1259 = vmatpush1.bf16.msra.mxu0 %v1222
    %1260 = vmatprep.subr.bf16.mxu0 0
    %1261 = vmatpush1.bf16.msra.mxu0 %v1223
    %1262 = vmatprep.subr.bf16.mxu0 0
    %1263 = vmatpush1.bf16.msra.mxu0 %v1224
    %1264 = vmatprep.subr.bf16.mxu0 0
    %1265 = vmatpush1.bf16.msra.mxu0 %v1225
    %1266 = vmatprep.subr.bf16.mxu0 0
    %1267 = vmatpush1.bf16.msra.mxu0 %v1226
    %1268 = vmatprep.subr.bf16.mxu0 0
    %1269 = vmatpush1.bf16.msra.mxu0 %v1227
    %1270 = vmatprep.subr.bf16.mxu0 0
    %1271 = vmatpush1.bf16.msra.mxu0 %v1228
    %1272 = vmatprep.subr.bf16.mxu0 0
    %1273 = vmatpush1.bf16.msra.mxu0 %v1229
    %1274 = vmatprep.subr.bf16.mxu0 0
    %1275 = vmatpush1.bf16.msra.mxu0 %v1230
    %1276 = vmatprep.subr.bf16.mxu0 0
    %1277 = vmatpush1.bf16.msra.mxu0 %v1231
    %1278 = vmatprep.subr.bf16.mxu0 0
    %1279 = vmatpush1.bf16.msra.mxu0 %v1232
    %1280 = vmatprep.subr.bf16.mxu0 0
    %1281 = vmatpush1.bf16.msra.mxu0 %v1233
    %1282 = vmatprep.mubr.bf16.mxu0 %v1114
    %1283 = vmatmul.mubr.bf16.gmra.mrb[0].mxu0 %v1113
    %v1284 = vpop.f32.mrb[0].mxu0
    %v1285 = vadd.f32 %v1152, %v1284
    %v1286 = vpop.f32.mrb[0].mxu0
    %v1287 = vpop.f32.mrb[0].mxu0
    %v1288 = vpop.f32.mrb[0].mxu0
    %1289 = vdwg.mxu0
    %v1290 = vpack.c.bf16 %v1285, %v1285
    %1291 = vst [vmem:[%s7] sm:$0xf] %v1290
    // Predicated region
    $region46: #{linear_model_forward.1} parent=1 // pred_check
      _
    $region47: #{linear_model_forward.1} parent=1 // pred_check_branch
      %1293 = sbr.rel (0) target = $region49
    $region48: #{linear_model_forward.1} parent=1 // pred_region
      _
    $region49: #{linear_model_forward.1} parent=1 // pred_fallthru
      _
    // Predicated region
    $region50: #{linear_model_forward.1} parent=1 // pred_check
      _
    $region51: #{linear_model_forward.1} parent=1 // pred_check_branch
      %1295 = sbr.rel (0) target = $region53
    $region52: #{linear_model_forward.1} parent=1 // pred_region
      _
    $region53: #{linear_model_forward.1} parent=1 // pred_fallthru
      _
    %1296 = vsyncpa [#allocation3], 1
    %1297 = vsyncpa [#allocation5], 1
    %1298 = vsyncpa [#allocation8], 1

</llo_original>
